<compile_context>
chip_gen: v7x
topology: tpu7x:2x2x1
jax: 0.10.0
libtpu: 0.0.40
codegen_flags: <defaults>
</compile_context>

<pallas_src>
import functools

import jax
import jax.numpy as jnp
from jax.experimental import pallas as pl
from jax.experimental.pallas import tpu as pltpu


def _round_up(x, m):
    return (x + m - 1) // m * m


def _round_down(x, m):
    return max(m, x // m * m)


def _chip_config():
    """Generation-aware knobs: forced 2-way row split only on 2-TC chips (v7x),
    bigger tiles / VMEM budget on big-VMEM single-TC chips (v5e / v6e)."""
    try:
        kind = jax.devices()[0].device_kind.lower()
    except Exception:
        kind = ""
    if "v7" in kind:
        return {"num_tc": 2, "vmem_limit": 32 << 20, "tm_cap": 512}
    if "v6" in kind or "v5" in kind:
        return {"num_tc": 1, "vmem_limit": 64 << 20, "tm_cap": 1024}
    # Unknown generation: conservative VMEM, no forced core split.
    return {"num_tc": 1, "vmem_limit": 32 << 20, "tm_cap": 512}


# -----------------------------------------------------------------------------
# Kernel 1: im2col matmul + folded BN + ReLU (conv1), bf16 channel-last output
# -----------------------------------------------------------------------------


def conv_bn_relu_kernel(a_ref, w_ref, scale_ref, shift_ref, o_ref):
    """o = relu((a @ w) * scale + shift) -- conv (im2col) + folded BN + ReLU."""
    acc = jnp.dot(a_ref[...], w_ref[...], preferred_element_type=jnp.float32)
    o_ref[...] = jnp.maximum(acc * scale_ref[...] + shift_ref[...], 0.0).astype(o_ref.dtype)


def conv_bn_relu_matmul(a, w, scale, shift, cfg):
    """relu((a @ w) * scale + shift).  a:(M,K) bf16, w:(K,N) bf16 -> (M,N) bf16.

    K is deliberately left unpadded (full-dim last block dim; Mosaic lane-pads
    in VMEM) and no host-side row padding / casting passes are emitted.
    """
    M, K = a.shape
    N = w.shape[1]

    # Row tile: split across TensorCores only where there are two of them.
    tm = _round_up(pl.cdiv(M, cfg["num_tc"]), 8)
    # VMEM safety cap: double-buffered bf16 A tile + bf16 out tile + resident weight.
    per_row = 2 * (K + N) * 2
    budget_rows = (cfg["vmem_limit"] // 2 - K * N * 2) // per_row
    tm = max(8, min(tm, cfg["tm_cap"], _round_down(budget_rows, 8)))

    return pl.pallas_call(
        conv_bn_relu_kernel,
        out_shape=jax.ShapeDtypeStruct((M, N), jnp.bfloat16),
        grid=(pl.cdiv(M, tm),),
        in_specs=[
            pl.BlockSpec((tm, K), lambda i: (i, 0)),   # full-K block, no host pad
            pl.BlockSpec((K, N), lambda i: (0, 0)),
            pl.BlockSpec((1, N), lambda i: (0, 0)),
            pl.BlockSpec((1, N), lambda i: (0, 0)),
        ],
        out_specs=pl.BlockSpec((tm, N), lambda i: (i, 0)),
        compiler_params=pltpu.CompilerParams(
            dimension_semantics=("parallel",),
            vmem_limit_bytes=cfg["vmem_limit"]),
    )(a, w, scale[None, :], shift[None, :])


# -----------------------------------------------------------------------------
# Kernel 2: conv2 (im2col matmul + BN + ReLU) fused with the spatial mean.
#           The conv2 feature map is never written to HBM -- only (B, 1, E).
# -----------------------------------------------------------------------------


def conv_bn_relu_mean_kernel(hw, a_ref, w_ref, scale_ref, shift_ref, o_ref, acc_ref):
    j = pl.program_id(1)

    @pl.when(j == 0)
    def _():
        acc_ref[...] = jnp.zeros_like(acc_ref)

    acc = jnp.dot(a_ref[0], w_ref[...], preferred_element_type=jnp.float32)
    y = jnp.maximum(acc * scale_ref[...] + shift_ref[...], 0.0)
    tm = y.shape[0]
    row = jax.lax.broadcasted_iota(jnp.int32, (tm, 1), 0) + j * tm
    y = jnp.where(row < hw, y, 0.0)          # mask ragged / out-of-range rows
    acc_ref[...] += jnp.sum(y, axis=0, keepdims=True)

    @pl.when(j == pl.num_programs(1) - 1)
    def _():
        o_ref[0] = acc_ref[...] * (1.0 / hw)


def conv_bn_relu_spatial_mean(a, w, scale, shift, cfg):
    """mean_hw relu((a @ w) * scale + shift).  a:(B,HW,K) bf16 -> (B,1,N) f32."""
    B, HW, K = a.shape
    N = w.shape[1]

    tm = min(cfg["tm_cap"], _round_up(HW, 8))
    per_row = 2 * K * 2
    budget_rows = (cfg["vmem_limit"] // 2 - K * N * 2) // per_row
    tm = max(8, min(tm, _round_down(budget_rows, 8)))

    kernel = functools.partial(conv_bn_relu_mean_kernel, HW)
    return pl.pallas_call(
        kernel,
        out_shape=jax.ShapeDtypeStruct((B, 1, N), jnp.float32),
        grid=(B, pl.cdiv(HW, tm)),
        in_specs=[
            pl.BlockSpec((1, tm, K), lambda b, j: (b, j, 0)),
            pl.BlockSpec((K, N), lambda b, j: (0, 0)),
            pl.BlockSpec((1, N), lambda b, j: (0, 0)),
            pl.BlockSpec((1, N), lambda b, j: (0, 0)),
        ],
        out_specs=pl.BlockSpec((1, 1, N), lambda b, j: (b, 0, 0)),
        scratch_shapes=[pltpu.VMEM((1, N), jnp.float32)],
        compiler_params=pltpu.CompilerParams(
            dimension_semantics=("parallel", "arbitrary"),
            vmem_limit_bytes=cfg["vmem_limit"]),
    )(a, w, scale[None, :], shift[None, :])


# -----------------------------------------------------------------------------
# Kernel 3: queries + 3x TransformerEncoderLayer + heads + sigmoid (per batch)
# -----------------------------------------------------------------------------


def _layernorm(x, g, b, eps=1e-5):
    mu = jnp.mean(x, axis=-1, keepdims=True)
    xc = x - mu
    var = jnp.mean(xc * xc, axis=-1, keepdims=True)
    return xc * jax.lax.rsqrt(var + eps) * g + b


def fused_transformer_kernel(nhead, num_layers,
                             mean_ref, qe_ref, bigmask_ref, segsum_ref,
                             wq_ref, wk_ref, wv_ref,
                             bq_ref, bk_ref, bv_ref,
                             wo_ref, bo_ref,
                             w1_ref, b1_ref, w2_ref, b2_ref,
                             g1_ref, be1_ref, g2_ref, be2_ref,
                             wh_ref, bh_ref, o_ref):
    """Whole post-conv pipeline for ONE batch element (post-norm, eval mode)."""
    Q, E = qe_ref.shape
    dh = E // nhead
    scale = 1.0 / (dh ** 0.5)
    bf = jnp.bfloat16

    bigmask = bigmask_ref[...]            # (H*Q, E) one-hot head-column masks
    segsum = segsum_ref[...]              # (H*Q, H*Q) block-diag ones (segment sums)

    t = qe_ref[...] + mean_ref[0]         # (Q, E): queries + spatial mean

    for l in range(num_layers):           # static unroll (L = 3)
        x = t
        xb = x.astype(bf)
        q = jnp.dot(xb, wq_ref[l], preferred_element_type=jnp.float32) + bq_ref[l]
        k = jnp.dot(xb, wk_ref[l], preferred_element_type=jnp.float32) + bk_ref[l]
        v = jnp.dot(xb, wv_ref[l], preferred_element_type=jnp.float32) + bv_ref[l]

        # Stacked masked heads: row h*Q + i of {k,v}_stack holds {k,v}[i] * mask_h,
        # so all per-head score / value matmuls collapse into two full-width MXU ops
        # and the head outputs land directly in concatenated (Q, E) layout.
        k_stack = jnp.broadcast_to(k[None], (nhead, Q, E)).reshape(nhead * Q, E) * bigmask
        v_stack = jnp.broadcast_to(v[None], (nhead, Q, E)).reshape(nhead * Q, E) * bigmask

        s = jax.lax.dot_general(
            (q * scale).astype(bf), k_stack.astype(bf),
            (((1,), (1,)), ((), ())), preferred_element_type=jnp.float32)   # (Q, H*Q)

        # Segmented softmax: shared per-row max (mathematically identical, stable),
        # per-head denominators via one matmul (no lane-splitting reshape).
        mx = jnp.max(s, axis=-1, keepdims=True)
        e = jnp.exp(s - mx)
        denom = jnp.dot(e, segsum, preferred_element_type=jnp.float32)      # (Q, H*Q)
        p = e * pl.reciprocal(denom, approx=True)

        oh = jnp.dot(p.astype(bf), v_stack.astype(bf),
                     preferred_element_type=jnp.float32)                    # (Q, E)

        attn = jnp.dot(oh.astype(bf), wo_ref[l],
                       preferred_element_type=jnp.float32) + bo_ref[l]
        y = _layernorm(x + attn, g1_ref[l], be1_ref[l])

        yb = y.astype(bf)
        h1 = jnp.maximum(
            jnp.dot(yb, w1_ref[l], preferred_element_type=jnp.float32) + b1_ref[l], 0.0)
        ff = jnp.dot(h1.astype(bf), w2_ref[l],
                     preferred_element_type=jnp.float32) + b2_ref[l]
        t = _layernorm(y + ff, g2_ref[l], be2_ref[l])

    # Detection heads (bbox | confidence) + EXACT sigmoid epilogue.
    logits = jnp.dot(t, wh_ref[...], preferred_element_type=jnp.float32) + bh_ref[...]
    o_ref[0] = 1.0 / (1.0 + jnp.exp(-logits))


def transformer_and_heads(mean_be, p, cfg):
    B = mean_be.shape[0]
    E = p["hidden_dim"]
    Q = p["num_queries"]
    nhead = p["nhead"]
    layers = p["layers"]
    L = len(layers)
    dff = layers[0]["lin1_w"].shape[0]
    dh = E // nhead
    bf = jnp.bfloat16

    # Per-layer params stacked on a leading L axis, pre-transposed into x@W form.
    # Q/K/V weights are split host-side -> no 32/64-lane-offset slices in-kernel.
    wq = jnp.stack([lp["in_proj_w"][:E].T for lp in layers]).astype(bf)
    wk = jnp.stack([lp["in_proj_w"][E:2 * E].T for lp in layers]).astype(bf)
    wv = jnp.stack([lp["in_proj_w"][2 * E:].T for lp in layers]).astype(bf)
    bq = jnp.stack([lp["in_proj_b"][None, :E] for lp in layers])
    bk = jnp.stack([lp["in_proj_b"][None, E:2 * E] for lp in layers])
    bv = jnp.stack([lp["in_proj_b"][None, 2 * E:] for lp in layers])
    wo = jnp.stack([lp["out_w"].T for lp in layers]).astype(bf)
    bo = jnp.stack([lp["out_b"][None, :] for lp in layers])
    w1 = jnp.stack([lp["lin1_w"].T for lp in layers]).astype(bf)
    b1 = jnp.stack([lp["lin1_b"][None, :] for lp in layers])
    w2 = jnp.stack([lp["lin2_w"].T for lp in layers]).astype(bf)
    b2 = jnp.stack([lp["lin2_b"][None, :] for lp in layers])
    g1 = jnp.stack([lp["ln1_g"][None, :] for lp in layers])
    be1 = jnp.stack([lp["ln1_b"][None, :] for lp in layers])
    g2 = jnp.stack([lp["ln2_g"][None, :] for lp in layers])
    be2 = jnp.stack([lp["ln2_b"][None, :] for lp in layers])

    wh = jnp.concatenate([p["bbox_w"].T, p["conf_w"].T], axis=1)       # (E, 5)
    bh = jnp.concatenate([p["bbox_b"], p["conf_b"]])[None, :]          # (1, 5)

    # Stacked head masks (H*Q, E) and block-diagonal segment-sum matrix (H*Q, H*Q).
    seg = jnp.repeat(jnp.arange(nhead), Q)
    bigmask = (jnp.arange(E)[None, :] // dh == seg[:, None]).astype(jnp.float32)
    segsum = (seg[:, None] == seg[None, :]).astype(jnp.float32)

    def full(shape):
        return pl.BlockSpec(shape, lambda b: (0,) * len(shape))

    kernel = functools.partial(fused_transformer_kernel, nhead, L)

    # TODO(synk): on single-TC chips both batch elements could share one grid step
    # (batch-block-diagonal attention) to halve step count; kept grid=(B,) for
    # simplicity (overhead is ~0.35us/step).
    return pl.pallas_call(
        kernel,
        out_shape=jax.ShapeDtypeStruct((B, Q, 5), jnp.float32),
        grid=(B,),
        in_specs=[
            pl.BlockSpec((1, 1, E), lambda b: (b, 0, 0)),      # per-batch spatial mean
            full((Q, E)),
            full((nhead * Q, E)),
            full((nhead * Q, nhead * Q)),
            full((L, E, E)), full((L, E, E)), full((L, E, E)),
            full((L, 1, E)), full((L, 1, E)), full((L, 1, E)),
            full((L, E, E)), full((L, 1, E)),
            full((L, E, dff)), full((L, 1, dff)),
            full((L, dff, E)), full((L, 1, E)),
            full((L, 1, E)), full((L, 1, E)),
            full((L, 1, E)), full((L, 1, E)),
            full((E, 5)), full((1, 5)),
        ],
        out_specs=pl.BlockSpec((1, Q, 5), lambda b: (b, 0, 0)),
        compiler_params=pltpu.CompilerParams(
            dimension_semantics=("parallel",),
            vmem_limit_bytes=cfg["vmem_limit"]),
    )(mean_be, p["query_embed"], bigmask, segsum,
      wq, wk, wv, bq, bk, bv, wo, bo,
      w1, b1, w2, b2, g1, be1, g2, be2, wh, bh)


# -----------------------------------------------------------------------------
# Glue: NHWC im2col (bf16), parameter init, full forward
# -----------------------------------------------------------------------------


def im2col_nhwc(x, kh, kw, stride, pad):
    """x: (B,H,W,C) -> (B*Ho*Wo, kh*kw*C) patch matrix (kh slow, kw, C fast)."""
    # TODO(synk): for production-size inputs, fuse patch extraction into the conv
    # kernel (overlapping-window DMA) to avoid the kh*kw HBM blow-up; fine at toy sizes.
    B, H, W, C = x.shape
    Ho = (H + 2 * pad - kh) // stride + 1
    Wo = (W + 2 * pad - kw) // stride + 1
    xp = jnp.pad(x, ((0, 0), (pad, pad), (pad, pad), (0, 0)))
    cols = []
    for i in range(kh):
        for j in range(kw):
            cols.append(xp[:, i:i + stride * Ho:stride, j:j + stride * Wo:stride, :])
    cols = jnp.stack(cols, axis=3)                      # (B, Ho, Wo, kh*kw, C)
    return cols.reshape(B * Ho * Wo, kh * kw * C), Ho, Wo


def init_params(key, hidden_dim=32, num_queries=8, nhead=8, dff=64, num_layers=3):
    keys = iter(jax.random.split(key, 128))
    n = lambda shape, s=0.1: s * jax.random.normal(next(keys), shape, jnp.float32)
    u = lambda shape: 0.9 + 0.2 * jax.random.uniform(next(keys), shape, jnp.float32)

    p = {
        "hidden_dim": hidden_dim, "num_queries": num_queries, "nhead": nhead,
        "conv1_w": n((hidden_dim, 3, 7, 7)), "conv1_b": n((hidden_dim,)),
        "bn1_gamma": u((hidden_dim,)), "bn1_beta": n((hidden_dim,)),
        "bn1_mean": n((hidden_dim,)), "bn1_var": u((hidden_dim,)),
        "conv2_w": n((hidden_dim, hidden_dim, 3, 3)), "conv2_b": n((hidden_dim,)),
        "bn2_gamma": u((hidden_dim,)), "bn2_beta": n((hidden_dim,)),
        "bn2_mean": n((hidden_dim,)), "bn2_var": u((hidden_dim,)),
        "query_embed": n((num_queries, hidden_dim), s=1.0),
        "bbox_w": n((4, hidden_dim)), "bbox_b": n((4,)),
        "conf_w": n((1, hidden_dim)), "conf_b": n((1,)),
        "layers": [],
    }
    for _ in range(num_layers):
        p["layers"].append({
            "in_proj_w": n((3 * hidden_dim, hidden_dim)),
            "in_proj_b": n((3 * hidden_dim,)),
            "out_w": n((hidden_dim, hidden_dim)), "out_b": n((hidden_dim,)),
            "lin1_w": n((dff, hidden_dim)), "lin1_b": n((dff,)),
            "lin2_w": n((hidden_dim, dff)), "lin2_b": n((hidden_dim,)),
            "ln1_g": u((hidden_dim,)), "ln1_b": n((hidden_dim,)),
            "ln2_g": u((hidden_dim,)), "ln2_b": n((hidden_dim,)),
        })
    return p


def focalnet_dino_forward(x, p):
    cfg = _chip_config()
    B = x.shape[0]
    hd = p["hidden_dim"]
    eps = 1e-5
    bf = jnp.bfloat16

    # NHWC + bf16 once up front: im2col then materializes the patch matrix directly
    # in bf16 channel-last layout (no separate pad / cast / relayout HBM passes).
    x_nhwc = x.transpose(0, 2, 3, 1).astype(bf)

    # ---- Conv(7,2,3) + BN + ReLU  (kernel 1, bf16 NHWC output) -----------------
    cols1, ho1, wo1 = im2col_nhwc(x_nhwc, 7, 7, 2, 3)
    w1 = p["conv1_w"].transpose(2, 3, 1, 0).reshape(-1, hd).astype(bf)   # (kh*kw*cin, hd)
    s1 = p["bn1_gamma"] / jnp.sqrt(p["bn1_var"] + eps)
    t1 = (p["conv1_b"] - p["bn1_mean"]) * s1 + p["bn1_beta"]
    f1 = conv_bn_relu_matmul(cols1, w1, s1, t1, cfg)           # (B*ho1*wo1, hd) bf16
    f1 = f1.reshape(B, ho1, wo1, hd)                           # NHWC, no transpose

    # ---- Conv(3,2,1) + BN + ReLU + spatial mean  (kernel 2, no f2 in HBM) ------
    cols2, ho2, wo2 = im2col_nhwc(f1, 3, 3, 2, 1)
    cols2 = cols2.reshape(B, ho2 * wo2, -1)
    w2 = p["conv2_w"].transpose(2, 3, 1, 0).reshape(-1, hd).astype(bf)
    s2 = p["bn2_gamma"] / jnp.sqrt(p["bn2_var"] + eps)
    t2 = (p["conv2_b"] - p["bn2_mean"]) * s2 + p["bn2_beta"]
    mean = conv_bn_relu_spatial_mean(cols2, w2, s2, t2, cfg)   # (B, 1, hd) f32

    # ---- queries + 3 transformer layers + heads + sigmoid  (kernel 3) ----------
    return transformer_and_heads(mean, p, cfg)                 # (B, Q, 5)


# -----------------------------------------------------------------------------

if __name__ == "__main__":
    key = jax.random.PRNGKey(0)
    k_params, k_x = jax.random.split(key)
    params = init_params(k_params, hidden_dim=32, num_queries=8, nhead=8,
                         dff=64, num_layers=3)
    x = jax.random.normal(k_x, (2, 3, 16, 16), jnp.float32)    # NCHW like PyTorch

    out = focalnet_dino_forward(x, params)
    out = jax.block_until_ready(out)
    assert out.shape == (2, 8, 5)
    assert bool(jnp.all(jnp.isfinite(out)))
    # TODO(synk): dropout in TransformerEncoderLayer is stochastic in train mode;
    # implemented here as identity (eval-mode semantics), BN uses running stats.
    print("KERNEL_OK")
</pallas_src>

<mosaic_0001>
module attributes {stable_mosaic.version = 11 : i64} {
  func.func @conv_bn_relu_kernel(%arg0: i32, %arg1: memref<128x147xbf16, #tpu.memory_space<vmem>>, %arg2: memref<147x32xbf16, #tpu.memory_space<vmem>>, %arg3: memref<1x32xf32, #tpu.memory_space<vmem>>, %arg4: memref<1x32xf32, #tpu.memory_space<vmem>>, %arg5: memref<128x32xbf16, #tpu.memory_space<vmem>>) attributes {dimension_semantics = [#tpu.dimension_semantics<parallel>], iteration_bounds = array<i64: 1>, scalar_prefetch = 0 : i64, scratch_operands = 0 : i64, tpu.core_type = #tpu.core_type<tc>, window_params = [{transform_indices = @transform_0, window_bounds = array<i64: 128, 147>}, {pipeline_mode = #tpu.pipeline_mode<synchronous>, transform_indices = @transform_1, window_bounds = array<i64: 147, 32>}, {pipeline_mode = #tpu.pipeline_mode<synchronous>, transform_indices = @transform_2, window_bounds = array<i64: 1, 32>}, {pipeline_mode = #tpu.pipeline_mode<synchronous>, transform_indices = @transform_3, window_bounds = array<i64: 1, 32>}, {transform_indices = @transform_4, window_bounds = array<i64: 128, 32>}]} {
    %c0 = arith.constant 0 : index
    %c0_0 = arith.constant 0 : index
    %0 = vector.load %arg1[%c0, %c0_0] : memref<128x147xbf16, #tpu.memory_space<vmem>>, vector<128x147xbf16>
    %c0_1 = arith.constant 0 : index
    %c0_2 = arith.constant 0 : index
    %1 = vector.load %arg2[%c0_1, %c0_2] : memref<147x32xbf16, #tpu.memory_space<vmem>>, vector<147x32xbf16>
    %cst = arith.constant dense<0.000000e+00> : vector<128x32xf32>
    %2 = tpu.matmul %0, %1, %cst {dimension_numbers = #tpu.dot_dimension_numbers<[1], [0], [0], [1], [0, 0, 1, 1], [], []>} : vector<128x147xbf16>, vector<147x32xbf16>, vector<128x32xf32> -> vector<128x32xf32>
    %c0_3 = arith.constant 0 : index
    %c0_4 = arith.constant 0 : index
    %3 = vector.load %arg3[%c0_3, %c0_4] : memref<1x32xf32, #tpu.memory_space<vmem>>, vector<1x32xf32>
    %4 = vector.broadcast %3 : vector<1x32xf32> to vector<128x32xf32>
    %5 = arith.mulf %2, %4 : vector<128x32xf32>
    %c0_5 = arith.constant 0 : index
    %c0_6 = arith.constant 0 : index
    %6 = vector.load %arg4[%c0_5, %c0_6] : memref<1x32xf32, #tpu.memory_space<vmem>>, vector<1x32xf32>
    %7 = vector.broadcast %6 : vector<1x32xf32> to vector<128x32xf32>
    %8 = arith.addf %5, %7 : vector<128x32xf32>
    %cst_7 = arith.constant 0.000000e+00 : f32
    %9 = vector.broadcast %cst_7 : f32 to vector<128x32xf32>
    %10 = arith.maximumf %8, %9 : vector<128x32xf32>
    %11 = arith.truncf %10 : vector<128x32xf32> to vector<128x32xbf16>
    %c0_8 = arith.constant 0 : index
    %c0_9 = arith.constant 0 : index
    %12 = vector.load %arg5[%c0_8, %c0_9] : memref<128x32xbf16, #tpu.memory_space<vmem>>, vector<128x32xbf16>
    tpu.vector_store %arg5[%c0_8, %c0_9], %11 {strides = array<i32>} : memref<128x32xbf16, #tpu.memory_space<vmem>>, vector<128x32xbf16>,
    return
  }
  func.func @transform_0(%arg0: i32) -> (i32, i32) {
    %c0_i32 = arith.constant 0 : i32
    %c0_i32_0 = arith.constant 0 : i32
    return %arg0, %c0_i32 : i32, i32
  }
  func.func @transform_1(%arg0: i32) -> (i32, i32) {
    %c0_i32 = arith.constant 0 : i32
    %c0_i32_0 = arith.constant 0 : i32
    %c0_i32_1 = arith.constant 0 : i32
    return %c0_i32, %c0_i32_0 : i32, i32
  }
  func.func @transform_2(%arg0: i32) -> (i32, i32) {
    %c0_i32 = arith.constant 0 : i32
    %c0_i32_0 = arith.constant 0 : i32
    %c0_i32_1 = arith.constant 0 : i32
    return %c0_i32, %c0_i32_0 : i32, i32
  }
  func.func @transform_3(%arg0: i32) -> (i32, i32) {
    %c0_i32 = arith.constant 0 : i32
    %c0_i32_0 = arith.constant 0 : i32
    %c0_i32_1 = arith.constant 0 : i32
    return %c0_i32, %c0_i32_0 : i32, i32
  }
  func.func @transform_4(%arg0: i32) -> (i32, i32) {
    %c0_i32 = arith.constant 0 : i32
    %c0_i32_0 = arith.constant 0 : i32
    return %arg0, %c0_i32 : i32, i32
  }
}

</mosaic_0001>

<llo_original>
// kernel: tpu_custom_call.1
$region0: #{tpu_custom_call.1}
  #allocation0 [shape = 'u32[]', space=smem, size = 0x4, offset = 0x4, fixed_abs, tag = 'smem constant byte address 0x4 - core index']
  #allocation1 [shape = 'u32[144,128]{1,0:T(1,128)}', space=vmem, size = 0x12000, scoped, tag = 'internal scratch']
  %s0 = inlined_call_operand.vmem [shape: bf16[128,147], index: 0, kind: input, shape index: {}]
  %s1 = inlined_call_operand.vmem [shape: bf16[147,32], index: 1, kind: input, shape index: {}]
  %s2 = inlined_call_operand.vmem [shape: f32[1,32], index: 2, kind: input, shape index: {}]
  %s3 = inlined_call_operand.vmem [shape: f32[1,32], index: 3, kind: input, shape index: {}]
  %s4 = inlined_call_operand.vmem [shape: bf16[128,32], index: 4, kind: output, shape index: {}]
  %s5 = sld [smem:[#allocation0]]
  $region26: #{tpu_custom_call.1} parent=0
    _
  %s7 = ssub.s32 1, %s5
  %s8 = scalar_select 0, %s7, %s5
  // Predicated region
  $region2: #{tpu_custom_call.1} parent=0 // pred_check
    _
  $region3: #{tpu_custom_call.1} parent=0 // pred_check_branch
    %10 = sbr.rel (0) target = $region5
  $region4: #{tpu_custom_call.1} parent=0 // pred_region
    _
  $region5: #{tpu_custom_call.1} parent=0 // pred_fallthru
    _
  // Predicated region
  $region6: #{tpu_custom_call.1} parent=0 // pred_check
    _
  $region7: #{tpu_custom_call.1} parent=0 // pred_check_branch
    %12 = sbr.rel (0) target = $region9
  $region8: #{tpu_custom_call.1} parent=0 // pred_region
    _
  $region9: #{tpu_custom_call.1} parent=0 // pred_fallthru
    _
  // Predicated region
  $region10: #{tpu_custom_call.1} parent=0 // pred_check
    _
  $region11: #{tpu_custom_call.1} parent=0 // pred_check_branch
    %14 = sbr.rel (0) target = $region13
  $region12: #{tpu_custom_call.1} parent=0 // pred_region
    _
  $region13: #{tpu_custom_call.1} parent=0 // pred_fallthru
    _
  // Predicated region
  $region14: #{tpu_custom_call.1} parent=0 // pred_check
    _
  $region15: #{tpu_custom_call.1} parent=0 // pred_check_branch
    %16 = sbr.rel (0) target = $region17
  $region16: #{tpu_custom_call.1} parent=0 // pred_region
    _
  $region17: #{tpu_custom_call.1} parent=0 // pred_fallthru
    _
  %v18 = vld [vmem:[%s0] sm:$0xff]
  %v19 = vld [vmem:[%s0 + $0x8] sm:$0xff]
  %v20 = vld [vmem:[%s0 + $0x10] sm:$0xff]
  %v21 = vld [vmem:[%s0 + $0x18] sm:$0xff]
  %v22 = vld [vmem:[%s0 + $0x20] sm:$0xff]
  %v23 = vld [vmem:[%s0 + $0x28] sm:$0xff]
  %v24 = vld [vmem:[%s0 + $0x30] sm:$0xff]
  %v25 = vld [vmem:[%s0 + $0x38] sm:$0xff]
  %v26 = vld [vmem:[%s0 + $0x40] sm:$0xff]
  %v27 = vld [vmem:[%s0 + $0x48] sm:$0xff]
  %v28 = vld [vmem:[%s0 + $0x50] sm:$0xff]
  %v29 = vld [vmem:[%s0 + $0x58] sm:$0xff]
  %v30 = vld [vmem:[%s0 + $0x60] sm:$0xff]
  %v31 = vld [vmem:[%s0 + $0x68] sm:$0xff]
  %v32 = vld [vmem:[%s0 + $0x70] sm:$0xff]
  %v33 = vld [vmem:[%s0 + $0x78] sm:$0xff]
  %v34 = vld [vmem:[%s1] sm:$0xf]
  %v35 = vld [vmem:[%s1 + $0x4] sm:$0xf]
  %v36 = vld [vmem:[%s1 + $0x8] sm:$0xf]
  %v37 = vld [vmem:[%s1 + $0xc] sm:$0xf]
  %v38 = vld [vmem:[%s1 + $0x10] sm:$0xf]
  %v39 = vld [vmem:[%s1 + $0x14] sm:$0xf]
  %v40 = vld [vmem:[%s1 + $0x18] sm:$0xf]
  %v41 = vld [vmem:[%s1 + $0x1c] sm:$0xf]
  %v42 = vld [vmem:[%s1 + $0x20] sm:$0xf]
  %v43 = vld [vmem:[%s1 + $0x24] sm:$0xf]
  %v44 = vld [vmem:[%s1 + $0x28] sm:$0xf]
  %v45 = vld [vmem:[%s1 + $0x2c] sm:$0xf]
  %v46 = vld [vmem:[%s1 + $0x30] sm:$0xf]
  %v47 = vld [vmem:[%s1 + $0x34] sm:$0xf]
  %v48 = vld [vmem:[%s1 + $0x38] sm:$0xf]
  %v49 = vld [vmem:[%s1 + $0x3c] sm:$0xf]
  %v50 = vld [vmem:[%s1 + $0x40] sm:$0xf]
  %v51 = vld [vmem:[%s1 + $0x44] sm:$0xf]
  %v52 = vld [vmem:[%s1 + $0x48] sm:$0x3]
  %v69 = vunpack.c.l.b16 %v18
  %v70 = vunpack.c.h.b16 %v18
  %v71 = vunpack.c.l.b16 %v19
  %v72 = vunpack.c.h.b16 %v19
  %v73 = vunpack.c.l.b16 %v20
  %v74 = vunpack.c.h.b16 %v20
  %v75 = vunpack.c.l.b16 %v21
  %v76 = vunpack.c.h.b16 %v21
  %v77 = vunpack.c.l.b16 %v22
  %v78 = vunpack.c.h.b16 %v22
  %v79 = vunpack.c.l.b16 %v23
  %v80 = vunpack.c.h.b16 %v23
  %v81 = vunpack.c.l.b16 %v24
  %v82 = vunpack.c.h.b16 %v24
  %v83 = vunpack.c.l.b16 %v25
  %v84 = vunpack.c.h.b16 %v25
  %v85 = vunpack.c.l.b16 %v26
  %v86 = vunpack.c.h.b16 %v26
  %v87 = vunpack.c.l.b16 %v27
  %v88 = vunpack.c.h.b16 %v27
  %v89 = vunpack.c.l.b16 %v28
  %v90 = vunpack.c.h.b16 %v28
  %v91 = vunpack.c.l.b16 %v29
  %v92 = vunpack.c.h.b16 %v29
  %v93 = vunpack.c.l.b16 %v30
  %v94 = vunpack.c.h.b16 %v30
  %v95 = vunpack.c.l.b16 %v31
  %v96 = vunpack.c.h.b16 %v31
  %v97 = vunpack.c.l.b16 %v32
  %v98 = vunpack.c.h.b16 %v32
  %v99 = vunpack.c.l.b16 %v33
  %v100 = vunpack.c.h.b16 %v33
  %v101 = vpack.c.b16 %v71, %v69
  %v102 = vpack.c.b16 %v72, %v70
  %v103 = vpack.c.b16 %v75, %v73
  %v104 = vpack.c.b16 %v76, %v74
  %v105 = vpack.c.b16 %v79, %v77
  %v106 = vpack.c.b16 %v80, %v78
  %v107 = vpack.c.b16 %v83, %v81
  %v108 = vpack.c.b16 %v84, %v82
  %v109 = vpack.c.b16 %v87, %v85
  %v110 = vpack.c.b16 %v88, %v86
  %v111 = vpack.c.b16 %v91, %v89
  %v112 = vpack.c.b16 %v92, %v90
  %v113 = vpack.c.b16 %v95, %v93
  %v114 = vpack.c.b16 %v96, %v94
  %v115 = vpack.c.b16 %v99, %v97
  %v116 = vpack.c.b16 %v100, %v98
  %v144 = vunpack.c.l.b16 %v34
  %v145 = vunpack.c.l.b16 %v35
  %v146 = vunpack.c.l.b16 %v36
  %v147 = vunpack.c.l.b16 %v37
  %v148 = vunpack.c.l.b16 %v38
  %v149 = vunpack.c.l.b16 %v39
  %v150 = vunpack.c.l.b16 %v40
  %v151 = vunpack.c.l.b16 %v41
  %v152 = vunpack.c.l.b16 %v42
  %v153 = vunpack.c.l.b16 %v43
  %v154 = vunpack.c.l.b16 %v44
  %v155 = vunpack.c.l.b16 %v45
  %v156 = vunpack.c.l.b16 %v46
  %v157 = vunpack.c.l.b16 %v47
  %v158 = vunpack.c.l.b16 %v48
  %v159 = vunpack.c.l.b16 %v49
  %v160 = vunpack.c.l.b16 %v50
  %v161 = vunpack.c.l.b16 %v51
  %v162 = vunpack.c.l.b16 %v52
  %v163 = vpack.c.b16 %v145, %v144
  %v164 = vpack.c.b16 %v147, %v146
  %v165 = vpack.c.b16 %v149, %v148
  %v166 = vpack.c.b16 %v151, %v150
  %v167 = vpack.c.b16 %v153, %v152
  %v168 = vpack.c.b16 %v155, %v154
  %v169 = vpack.c.b16 %v157, %v156
  %v170 = vpack.c.b16 %v159, %v158
  %v171 = vpack.c.b16 %v161, %v160
  %v172 = vpack.c.b16 %v162, %v162
  %vm182 = vcmask 154624
  %v184 = vsel %vm182, %v102, 0
  %v187 = vsel %vm182, %v104, 0
  %v190 = vsel %vm182, %v106, 0
  %v193 = vsel %vm182, %v108, 0
  %v196 = vsel %vm182, %v110, 0
  %v199 = vsel %vm182, %v112, 0
  %v202 = vsel %vm182, %v114, 0
  %v205 = vsel %vm182, %v116, 0
  %vm207 = vcmask 1040384
  %vm208 = vcmask 1041408
  %v209 = vsel %vm207, 4294967295, 65535
  %v210 = vsel %vm208, %v209, 0
  %v212 = vand.u32 %v172, %v210
  %214 = vmatprep.subr.bf16.mxu0 0
  %215 = vmatpush1.bf16.msra.mxu0 %v163
  %216 = vmatprep.subr.bf16.mxu0 0
  %217 = vmatpush1.bf16.msra.mxu0 %v164
  %218 = vmatprep.subr.bf16.mxu0 0
  %219 = vmatpush1.bf16.msra.mxu0 %v165
  %220 = vmatprep.subr.bf16.mxu0 0
  %221 = vmatpush1.bf16.msra.mxu0 %v166
  %222 = vmatprep.subr.bf16.mxu0 0
  %223 = vmatpush1.bf16.msra.mxu0 %v167
  %224 = vmatprep.subr.bf16.mxu0 0
  %225 = vmatpush1.bf16.msra.mxu0 %v168
  %226 = vmatprep.subr.bf16.mxu0 0
  %227 = vmatpush1.bf16.msra.mxu0 %v169
  %228 = vmatprep.subr.bf16.mxu0 0
  %229 = vmatpush1.bf16.msra.mxu0 %v170
  %230 = vmatprep.subr.bf16.mxu0 0
  %231 = vmatpush1.bf16.msra.mxu0 %v171
  %232 = vmatprep.subr.bf16.mxu0 0
  %233 = vmatpush1.bf16.msra.mxu0 %v212
  %234 = vmatprep.subr.bf16.mxu0 0
  %235 = vmatpush1.bf16.msra.mxu0 0
  %236 = vmatprep.subr.bf16.mxu0 0
  %237 = vmatpush1.bf16.msra.mxu0 0
  %238 = vmatprep.subr.bf16.mxu0 0
  %239 = vmatpush1.bf16.msra.mxu0 0
  %240 = vmatprep.subr.bf16.mxu0 0
  %241 = vmatpush1.bf16.msra.mxu0 0
  %242 = vmatprep.subr.bf16.mxu0 0
  %243 = vmatpush1.bf16.msra.mxu0 0
  %244 = vmatprep.subr.bf16.mxu0 0
  %245 = vmatpush1.bf16.msra.mxu0 0
  %246 = vmatprep.mubr.bf16.mxu0 %v184
  %247 = vmatmul.mubr.bf16.gmra.mrb[0].mxu0 %v101
  %v248 = vpop.f32.mrb[0].mxu0
  %v249 = vadd.f32 0.0, %v248
  %v250 = vpop.f32.mrb[0].mxu0
  %v251 = vpop.f32.mrb[0].mxu0
  %v252 = vadd.f32 0.0, %v251
  %v253 = vpop.f32.mrb[0].mxu0
  %254 = vmatprep.mubr.bf16.mxu0 %v187
  %255 = vmatmul.mubr.bf16.gmra.mrb[0].mxu0 %v103
  %v256 = vpop.f32.mrb[0].mxu0
  %v257 = vadd.f32 0.0, %v256
  %v258 = vpop.f32.mrb[0].mxu0
  %v259 = vpop.f32.mrb[0].mxu0
  %v260 = vadd.f32 0.0, %v259
  %v261 = vpop.f32.mrb[0].mxu0
  %262 = vmatprep.mubr.bf16.mxu0 %v190
  %263 = vmatmul.mubr.bf16.gmra.mrb[0].mxu0 %v105
  %v264 = vpop.f32.mrb[0].mxu0
  %v265 = vadd.f32 0.0, %v264
  %v266 = vpop.f32.mrb[0].mxu0
  %v267 = vpop.f32.mrb[0].mxu0
  %v268 = vadd.f32 0.0, %v267
  %v269 = vpop.f32.mrb[0].mxu0
  %270 = vmatprep.mubr.bf16.mxu0 %v193
  %271 = vmatmul.mubr.bf16.gmra.mrb[0].mxu0 %v107
  %v272 = vpop.f32.mrb[0].mxu0
  %v273 = vadd.f32 0.0, %v272
  %v274 = vpop.f32.mrb[0].mxu0
  %v275 = vpop.f32.mrb[0].mxu0
  %v276 = vadd.f32 0.0, %v275
  %v277 = vpop.f32.mrb[0].mxu0
  %278 = vmatprep.mubr.bf16.mxu0 %v196
  %279 = vmatmul.mubr.bf16.gmra.mrb[0].mxu0 %v109
  %v280 = vpop.f32.mrb[0].mxu0
  %v281 = vadd.f32 0.0, %v280
  %v282 = vpop.f32.mrb[0].mxu0
  %v283 = vpop.f32.mrb[0].mxu0
  %v284 = vadd.f32 0.0, %v283
  %v285 = vpop.f32.mrb[0].mxu0
  %286 = vmatprep.mubr.bf16.mxu0 %v199
  %287 = vmatmul.mubr.bf16.gmra.mrb[0].mxu0 %v111
  %v288 = vpop.f32.mrb[0].mxu0
  %v289 = vadd.f32 0.0, %v288
  %v290 = vpop.f32.mrb[0].mxu0
  %v291 = vpop.f32.mrb[0].mxu0
  %v292 = vadd.f32 0.0, %v291
  %v293 = vpop.f32.mrb[0].mxu0
  %294 = vmatprep.mubr.bf16.mxu0 %v202
  %295 = vmatmul.mubr.bf16.gmra.mrb[0].mxu0 %v113
  %v296 = vpop.f32.mrb[0].mxu0
  %v297 = vadd.f32 0.0, %v296
  %v298 = vpop.f32.mrb[0].mxu0
  %v299 = vpop.f32.mrb[0].mxu0
  %v300 = vadd.f32 0.0, %v299
  %v301 = vpop.f32.mrb[0].mxu0
  %302 = vmatprep.mubr.bf16.mxu0 %v205
  %303 = vmatmul.mubr.bf16.gmra.mrb[0].mxu0 %v115
  %v304 = vpop.f32.mrb[0].mxu0
  %v305 = vadd.f32 0.0, %v304
  %v306 = vpop.f32.mrb[0].mxu0
  %v307 = vpop.f32.mrb[0].mxu0
  %v308 = vadd.f32 0.0, %v307
  %v309 = vpop.f32.mrb[0].mxu0
  %310 = vdwg.mxu0
  %v311 = vld [vmem:[%s2] sm:$0x1]
  %v313 = vlaneseq
  %v314 = vshrl.u32 %v313, 7
  %v315 = vsub.s32 0, %v314
  %v316 = vrot.slane %v311, %v315
  %v318 = vmul.f32 %v249, %v316
  %v319 = vmul.f32 %v252, %v316
  %v320 = vmul.f32 %v257, %v316
  %v321 = vmul.f32 %v260, %v316
  %v322 = vmul.f32 %v265, %v316
  %v323 = vmul.f32 %v268, %v316
  %v324 = vmul.f32 %v273, %v316
  %v325 = vmul.f32 %v276, %v316
  %v326 = vmul.f32 %v281, %v316
  %v327 = vmul.f32 %v284, %v316
  %v328 = vmul.f32 %v289, %v316
  %v329 = vmul.f32 %v292, %v316
  %v330 = vmul.f32 %v297, %v316
  %v331 = vmul.f32 %v300, %v316
  %v332 = vmul.f32 %v305, %v316
  %v333 = vmul.f32 %v308, %v316
  %v334 = vld [vmem:[%s3] sm:$0x1]
  %v336 = vlaneseq
  %v337 = vshrl.u32 %v336, 7
  %v338 = vsub.s32 0, %v337
  %v339 = vrot.slane %v334, %v338
  %v341 = vadd.f32 %v318, %v339
  %v342 = vadd.f32 %v319, %v339
  %v343 = vadd.f32 %v320, %v339
  %v344 = vadd.f32 %v321, %v339
  %v345 = vadd.f32 %v322, %v339
  %v346 = vadd.f32 %v323, %v339
  %v347 = vadd.f32 %v324, %v339
  %v348 = vadd.f32 %v325, %v339
  %v349 = vadd.f32 %v326, %v339
  %v350 = vadd.f32 %v327, %v339
  %v351 = vadd.f32 %v328, %v339
  %v352 = vadd.f32 %v329, %v339
  %v353 = vadd.f32 %v330, %v339
  %v354 = vadd.f32 %v331, %v339
  %v355 = vadd.f32 %v332, %v339
  %v356 = vadd.f32 %v333, %v339
  %v357 = vmax.f32 %v341, 0.0
  %v358 = vmax.f32 %v342, 0.0
  %v359 = vmax.f32 %v343, 0.0
  %v360 = vmax.f32 %v344, 0.0
  %v361 = vmax.f32 %v345, 0.0
  %v362 = vmax.f32 %v346, 0.0
  %v363 = vmax.f32 %v347, 0.0
  %v364 = vmax.f32 %v348, 0.0
  %v365 = vmax.f32 %v349, 0.0
  %v366 = vmax.f32 %v350, 0.0
  %v367 = vmax.f32 %v351, 0.0
  %v368 = vmax.f32 %v352, 0.0
  %v369 = vmax.f32 %v353, 0.0
  %v370 = vmax.f32 %v354, 0.0
  %v371 = vmax.f32 %v355, 0.0
  %v372 = vmax.f32 %v356, 0.0
  %v373 = vpack.c.bf16 %v358, %v357
  %v374 = vpack.c.bf16 %v360, %v359
  %v375 = vpack.c.bf16 %v362, %v361
  %v376 = vpack.c.bf16 %v364, %v363
  %v377 = vpack.c.bf16 %v366, %v365
  %v378 = vpack.c.bf16 %v368, %v367
  %v379 = vpack.c.bf16 %v370, %v369
  %v380 = vpack.c.bf16 %v372, %v371
  %v389 = vunpack.c.l.b16 %v373
  %v390 = vunpack.c.h.b16 %v373
  %v391 = vunpack.c.l.b16 %v374
  %v392 = vunpack.c.h.b16 %v374
  %v393 = vunpack.c.l.b16 %v375
  %v394 = vunpack.c.h.b16 %v375
  %v395 = vunpack.c.l.b16 %v376
  %v396 = vunpack.c.h.b16 %v376
  %v397 = vunpack.c.l.b16 %v377
  %v398 = vunpack.c.h.b16 %v377
  %v399 = vunpack.c.l.b16 %v378
  %v400 = vunpack.c.h.b16 %v378
  %v401 = vunpack.c.l.b16 %v379
  %v402 = vunpack.c.h.b16 %v379
  %v403 = vunpack.c.l.b16 %v380
  %v404 = vunpack.c.h.b16 %v380
  %v405 = vpack.c.b16 %v389, %v389
  %v406 = vpack.c.b16 %v390, %v390
  %v407 = vpack.c.b16 %v391, %v391
  %v408 = vpack.c.b16 %v392, %v392
  %v409 = vpack.c.b16 %v393, %v393
  %v410 = vpack.c.b16 %v394, %v394
  %v411 = vpack.c.b16 %v395, %v395
  %v412 = vpack.c.b16 %v396, %v396
  %v413 = vpack.c.b16 %v397, %v397
  %v414 = vpack.c.b16 %v398, %v398
  %v415 = vpack.c.b16 %v399, %v399
  %v416 = vpack.c.b16 %v400, %v400
  %v417 = vpack.c.b16 %v401, %v401
  %v418 = vpack.c.b16 %v402, %v402
  %v419 = vpack.c.b16 %v403, %v403
  %v420 = vpack.c.b16 %v404, %v404
  %vm437 = vcmask 257024
  %438 = vst.msk [vmem:[%s4] sm:$0xf] %vm437, %v405
  %439 = vst.msk [vmem:[%s4 + $0x4] sm:$0xf] %vm437, %v406
  %440 = vst.msk [vmem:[%s4 + $0x8] sm:$0xf] %vm437, %v407
  %441 = vst.msk [vmem:[%s4 + $0xc] sm:$0xf] %vm437, %v408
  %442 = vst.msk [vmem:[%s4 + $0x10] sm:$0xf] %vm437, %v409
  %443 = vst.msk [vmem:[%s4 + $0x14] sm:$0xf] %vm437, %v410
  %444 = vst.msk [vmem:[%s4 + $0x18] sm:$0xf] %vm437, %v411
  %445 = vst.msk [vmem:[%s4 + $0x1c] sm:$0xf] %vm437, %v412
  %446 = vst.msk [vmem:[%s4 + $0x20] sm:$0xf] %vm437, %v413
  %447 = vst.msk [vmem:[%s4 + $0x24] sm:$0xf] %vm437, %v414
  %448 = vst.msk [vmem:[%s4 + $0x28] sm:$0xf] %vm437, %v415
  %449 = vst.msk [vmem:[%s4 + $0x2c] sm:$0xf] %vm437, %v416
  %450 = vst.msk [vmem:[%s4 + $0x30] sm:$0xf] %vm437, %v417
  %451 = vst.msk [vmem:[%s4 + $0x34] sm:$0xf] %vm437, %v418
  %452 = vst.msk [vmem:[%s4 + $0x38] sm:$0xf] %vm437, %v419
  %453 = vst.msk [vmem:[%s4 + $0x3c] sm:$0xf] %vm437, %v420
  // Predicated region
  $region18: #{tpu_custom_call.1} parent=0 // pred_check
    _
  $region19: #{tpu_custom_call.1} parent=0 // pred_check_branch
    %455 = sbr.rel (0) target = $region21
  $region20: #{tpu_custom_call.1} parent=0 // pred_region
    _
  $region21: #{tpu_custom_call.1} parent=0 // pred_fallthru
    _
  // Predicated region
  $region22: #{tpu_custom_call.1} parent=0 // pred_check
    _
  $region23: #{tpu_custom_call.1} parent=0 // pred_check_branch
    %457 = sbr.rel (0) target = $region25
  $region24: #{tpu_custom_call.1} parent=0 // pred_region
    _
  $region25: #{tpu_custom_call.1} parent=0 // pred_fallthru
    _

</llo_original>
